<compile_context>
chip_gen: v6e
topology: v6e:2x2x1
jax: 0.10.0
libtpu: 0.0.40
codegen_flags: <defaults>
</compile_context>

<pallas_src>
import jax
import jax.numpy as jnp
from jax.experimental import pallas as pl
from jax.experimental.pallas import tpu as pltpu


def _round_up(n, m):
    return ((n + m - 1) // m) * m


def _mlp_kernel(x_ref, w1_ref, b1_ref, w2_ref, b2_ref, o_ref):
    # x_ref: (TB, D_in_p) bf16, weights bf16, biases f32, output f32.
    x = x_ref[...]
    # Layer 1: bf16 MXU matmul with f32 accumulation, bias + SiLU in f32.
    h = jnp.dot(x, w1_ref[...], preferred_element_type=jnp.float32) + b1_ref[...]
    h = h * jax.nn.sigmoid(h)                       # SiLU (mid_activation), f32 on VPU/EUP
    # Layer 2: cast activation back to bf16 for the MXU, accumulate in f32.
    y = jnp.dot(h.astype(jnp.bfloat16), w2_ref[...],
                preferred_element_type=jnp.float32) + b2_ref[...]
    o_ref[...] = jax.nn.sigmoid(y).astype(o_ref.dtype)   # Sigmoid (last_activation)


def _mlp_net_forward_impl(x, w1, b1, w2, b2, batch_tile=512):
    """Fused MLP forward. x: (B, D_in) f32; returns (B, D_out) f32."""
    B, D_in = x.shape
    H = w1.shape[1]
    D_out = w2.shape[1]

    # Lane-dense feature dims (multiples of 128); batch tile multiple of 16 (bf16 sublanes).
    D_in_p = _round_up(D_in, 128)
    H_p = _round_up(H, 128)
    D_out_p = _round_up(D_out, 128)
    TB = min(batch_tile, _round_up(B, 16))
    B_p = _round_up(B, TB)

    # One-time host-side padding; zero padding is mathematically inert for this MLP
    # (padded h columns are silu(0)=0 and padded W2 rows are 0).
    xp = jnp.zeros((B_p, D_in_p), jnp.bfloat16).at[:B, :D_in].set(x.astype(jnp.bfloat16))
    w1p = jnp.zeros((D_in_p, H_p), jnp.bfloat16).at[:D_in, :H].set(w1.astype(jnp.bfloat16))
    b1p = jnp.zeros((1, H_p), jnp.float32).at[:, :H].set(b1.astype(jnp.float32))
    w2p = jnp.zeros((H_p, D_out_p), jnp.bfloat16).at[:H, :D_out].set(w2.astype(jnp.bfloat16))
    b2p = jnp.zeros((1, D_out_p), jnp.float32).at[:, :D_out].set(b2.astype(jnp.float32))

    grid = (B_p // TB,)

    out_p = pl.pallas_call(
        _mlp_kernel,
        out_shape=jax.ShapeDtypeStruct((B_p, D_out_p), jnp.float32),
        grid_spec=pltpu.PrefetchScalarGridSpec(
            num_scalar_prefetch=0,
            grid=grid,
            in_specs=[
                # x: tiled over batch (double-buffered by the Pallas pipeline).
                pl.BlockSpec((TB, D_in_p), lambda i: (i, 0)),
                # Weights / biases: full-extent blocks, index_map ignores i -> VMEM-resident.
                pl.BlockSpec((D_in_p, H_p), lambda i: (0, 0)),
                pl.BlockSpec((1, H_p), lambda i: (0, 0)),
                pl.BlockSpec((H_p, D_out_p), lambda i: (0, 0)),
                pl.BlockSpec((1, D_out_p), lambda i: (0, 0)),
            ],
            out_specs=pl.BlockSpec((TB, D_out_p), lambda i: (i, 0)),
        ),
        compiler_params=pltpu.CompilerParams(
            dimension_semantics=("parallel",),   # shard batch tiles across TCs (v7x)
            vmem_limit_bytes=64 << 20,
        ),
    )(xp, w1p, b1p, w2p, b2p)

    return out_p[:B, :D_out]


mlp_net_forward = jax.jit(_mlp_net_forward_impl)


def init_params(key, input_dim, hidden_dim, output_dim):
    """Deterministic init mimicking PyTorch nn.Linear (uniform +/- 1/sqrt(fan_in))."""
    k1, k2, k3, k4 = jax.random.split(key, 4)
    lim1 = 1.0 / jnp.sqrt(jnp.float32(input_dim))
    lim2 = 1.0 / jnp.sqrt(jnp.float32(hidden_dim))
    w1 = jax.random.uniform(k1, (input_dim, hidden_dim), jnp.float32, -lim1, lim1)
    b1 = jax.random.uniform(k2, (1, hidden_dim), jnp.float32, -lim1, lim1)
    w2 = jax.random.uniform(k3, (hidden_dim, output_dim), jnp.float32, -lim2, lim2)
    b2 = jax.random.uniform(k4, (1, output_dim), jnp.float32, -lim2, lim2)
    return w1, b1, w2, b2


if __name__ == "__main__":
    batch, input_dim, hidden_dim, output_dim = 8, 16, 32, 8

    key = jax.random.PRNGKey(0)
    kx, kp = jax.random.split(key)
    x = jax.random.normal(kx, (batch, input_dim), jnp.float32)
    w1, b1, w2, b2 = init_params(kp, input_dim, hidden_dim, output_dim)

    out = mlp_net_forward(x, w1, b1, w2, b2)
    out = jax.block_until_ready(out)
    assert out.shape == (batch, output_dim)

    # Reference 1: same bf16 quantization of MXU inputs, f32 accumulation (tight check).
    xb, w1b, w2b = (a.astype(jnp.bfloat16) for a in (x, w1, w2))
    h_ref = jnp.dot(xb, w1b, preferred_element_type=jnp.float32) + b1
    h_ref = h_ref * jax.nn.sigmoid(h_ref)
    ref_bf16 = jax.nn.sigmoid(
        jnp.dot(h_ref.astype(jnp.bfloat16), w2b, preferred_element_type=jnp.float32) + b2)
    assert jnp.allclose(out, ref_bf16, atol=2e-3, rtol=2e-3)

    # Reference 2: pure f32 math (loose check for overall fidelity).
    h32 = x @ w1 + b1
    h32 = h32 * jax.nn.sigmoid(h32)
    ref_f32 = jax.nn.sigmoid(h32 @ w2 + b2)
    assert jnp.allclose(out, ref_f32, atol=3e-2, rtol=3e-2)

    print("KERNEL_OK")
</pallas_src>

<mosaic_0001>
module attributes {stable_mosaic.version = 11 : i64} {
  func.func @_mlp_kernel(%arg0: i32, %arg1: memref<16x128xbf16, #tpu.memory_space<vmem>>, %arg2: memref<128x128xbf16, #tpu.memory_space<vmem>>, %arg3: memref<1x128xf32, #tpu.memory_space<vmem>>, %arg4: memref<128x128xbf16, #tpu.memory_space<vmem>>, %arg5: memref<1x128xf32, #tpu.memory_space<vmem>>, %arg6: memref<16x128xf32, #tpu.memory_space<vmem>>) attributes {dimension_semantics = [#tpu.dimension_semantics<parallel>], iteration_bounds = array<i64: 1>, scalar_prefetch = 0 : i64, scratch_operands = 0 : i64, tpu.core_type = #tpu.core_type<tc>, window_params = [{transform_indices = @transform_0, window_bounds = array<i64: 16, 128>}, {pipeline_mode = #tpu.pipeline_mode<synchronous>, transform_indices = @transform_1, window_bounds = array<i64: 128, 128>}, {pipeline_mode = #tpu.pipeline_mode<synchronous>, transform_indices = @transform_2, window_bounds = array<i64: 1, 128>}, {pipeline_mode = #tpu.pipeline_mode<synchronous>, transform_indices = @transform_3, window_bounds = array<i64: 128, 128>}, {pipeline_mode = #tpu.pipeline_mode<synchronous>, transform_indices = @transform_4, window_bounds = array<i64: 1, 128>}, {transform_indices = @transform_5, window_bounds = array<i64: 16, 128>}]} {
    %c0 = arith.constant 0 : index
    %c0_0 = arith.constant 0 : index
    %0 = vector.load %arg1[%c0, %c0_0] : memref<16x128xbf16, #tpu.memory_space<vmem>>, vector<16x128xbf16>
    %c0_1 = arith.constant 0 : index
    %c0_2 = arith.constant 0 : index
    %1 = vector.load %arg2[%c0_1, %c0_2] : memref<128x128xbf16, #tpu.memory_space<vmem>>, vector<128x128xbf16>
    %cst = arith.constant dense<0.000000e+00> : vector<16x128xf32>
    %2 = tpu.matmul %0, %1, %cst {dimension_numbers = #tpu.dot_dimension_numbers<[1], [0], [0], [1], [0, 0, 1, 1], [], []>} : vector<16x128xbf16>, vector<128x128xbf16>, vector<16x128xf32> -> vector<16x128xf32>
    %c0_3 = arith.constant 0 : index
    %c0_4 = arith.constant 0 : index
    %3 = vector.load %arg3[%c0_3, %c0_4] : memref<1x128xf32, #tpu.memory_space<vmem>>, vector<1x128xf32>
    %4 = vector.broadcast %3 : vector<1x128xf32> to vector<16x128xf32>
    %5 = arith.addf %2, %4 : vector<16x128xf32>
    %6 = arith.negf %5 : vector<16x128xf32>
    %7 = math.exp %6 : vector<16x128xf32>
    %cst_5 = arith.constant 1.000000e+00 : f32
    %8 = vector.broadcast %cst_5 : f32 to vector<16x128xf32>
    %9 = arith.addf %8, %7 : vector<16x128xf32>
    %10 = arith.divf %8, %9 : vector<16x128xf32>
    %11 = arith.mulf %5, %10 : vector<16x128xf32>
    %12 = arith.truncf %11 : vector<16x128xf32> to vector<16x128xbf16>
    %c0_6 = arith.constant 0 : index
    %c0_7 = arith.constant 0 : index
    %13 = vector.load %arg4[%c0_6, %c0_7] : memref<128x128xbf16, #tpu.memory_space<vmem>>, vector<128x128xbf16>
    %cst_8 = arith.constant dense<0.000000e+00> : vector<16x128xf32>
    %14 = tpu.matmul %12, %13, %cst_8 {dimension_numbers = #tpu.dot_dimension_numbers<[1], [0], [0], [1], [0, 0, 1, 1], [], []>} : vector<16x128xbf16>, vector<128x128xbf16>, vector<16x128xf32> -> vector<16x128xf32>
    %c0_9 = arith.constant 0 : index
    %c0_10 = arith.constant 0 : index
    %15 = vector.load %arg5[%c0_9, %c0_10] : memref<1x128xf32, #tpu.memory_space<vmem>>, vector<1x128xf32>
    %16 = vector.broadcast %15 : vector<1x128xf32> to vector<16x128xf32>
    %17 = arith.addf %14, %16 : vector<16x128xf32>
    %18 = arith.negf %17 : vector<16x128xf32>
    %19 = math.exp %18 : vector<16x128xf32>
    %cst_11 = arith.constant 1.000000e+00 : f32
    %20 = vector.broadcast %cst_11 : f32 to vector<16x128xf32>
    %21 = arith.addf %20, %19 : vector<16x128xf32>
    %22 = arith.divf %20, %21 : vector<16x128xf32>
    %c0_12 = arith.constant 0 : index
    %c0_13 = arith.constant 0 : index
    %23 = vector.load %arg6[%c0_12, %c0_13] : memref<16x128xf32, #tpu.memory_space<vmem>>, vector<16x128xf32>
    tpu.vector_store %arg6[%c0_12, %c0_13], %22 {strides = array<i32>} : memref<16x128xf32, #tpu.memory_space<vmem>>, vector<16x128xf32>,
    return
  }
  func.func @transform_0(%arg0: i32) -> (i32, i32) {
    %c0_i32 = arith.constant 0 : i32
    %c0_i32_0 = arith.constant 0 : i32
    return %arg0, %c0_i32 : i32, i32
  }
  func.func @transform_1(%arg0: i32) -> (i32, i32) {
    %c0_i32 = arith.constant 0 : i32
    %c0_i32_0 = arith.constant 0 : i32
    %c0_i32_1 = arith.constant 0 : i32
    return %c0_i32, %c0_i32_0 : i32, i32
  }
  func.func @transform_2(%arg0: i32) -> (i32, i32) {
    %c0_i32 = arith.constant 0 : i32
    %c0_i32_0 = arith.constant 0 : i32
    %c0_i32_1 = arith.constant 0 : i32
    return %c0_i32, %c0_i32_0 : i32, i32
  }
  func.func @transform_3(%arg0: i32) -> (i32, i32) {
    %c0_i32 = arith.constant 0 : i32
    %c0_i32_0 = arith.constant 0 : i32
    %c0_i32_1 = arith.constant 0 : i32
    return %c0_i32, %c0_i32_0 : i32, i32
  }
  func.func @transform_4(%arg0: i32) -> (i32, i32) {
    %c0_i32 = arith.constant 0 : i32
    %c0_i32_0 = arith.constant 0 : i32
    %c0_i32_1 = arith.constant 0 : i32
    return %c0_i32, %c0_i32_0 : i32, i32
  }
  func.func @transform_5(%arg0: i32) -> (i32, i32) {
    %c0_i32 = arith.constant 0 : i32
    %c0_i32_0 = arith.constant 0 : i32
    return %arg0, %c0_i32 : i32, i32
  }
}

</mosaic_0001>

<llo_original>
// kernel: _mlp_net_forward_impl.1
$region0: #{_mlp_net_forward_impl.1}
  #allocation0 [shape = 'u32[]', space=smem, size = 0x4, offset = 0x4, fixed_abs, tag = 'smem constant byte address 0x4 - core index']
  #allocation1 [shape = 'u32[144,128]{1,0:T(1,128)}', space=vmem, size = 0x12000, scoped, tag = 'internal scratch']
  %s0 = inlined_call_operand.vmem [shape: bf16[16,128], index: 0, kind: input, shape index: {}]
  %s1 = inlined_call_operand.vmem [shape: bf16[128,128], index: 1, kind: input, shape index: {}]
  %s2 = inlined_call_operand.vmem [shape: f32[1,128], index: 2, kind: input, shape index: {}]
  %s3 = inlined_call_operand.vmem [shape: bf16[128,128], index: 3, kind: input, shape index: {}]
  %s4 = inlined_call_operand.vmem [shape: f32[1,128], index: 4, kind: input, shape index: {}]
  %s5 = inlined_call_operand.vmem [shape: f32[16,128], index: 5, kind: output, shape index: {}]
  %s6 = sld [smem:[#allocation0]]
  $region30: #{_mlp_net_forward_impl.1} parent=0
    _
  %s8 = ssub.s32 1, %s6
  %s9 = scalar_select 0, %s8, %s6
  // Predicated region
  $region2: #{_mlp_net_forward_impl.1} parent=0 // pred_check
    _
  $region3: #{_mlp_net_forward_impl.1} parent=0 // pred_check_branch
    %11 = sbr.rel (0) target = $region5
  $region4: #{_mlp_net_forward_impl.1} parent=0 // pred_region
    _
  $region5: #{_mlp_net_forward_impl.1} parent=0 // pred_fallthru
    _
  // Predicated region
  $region6: #{_mlp_net_forward_impl.1} parent=0 // pred_check
    _
  $region7: #{_mlp_net_forward_impl.1} parent=0 // pred_check_branch
    %13 = sbr.rel (0) target = $region9
  $region8: #{_mlp_net_forward_impl.1} parent=0 // pred_region
    _
  $region9: #{_mlp_net_forward_impl.1} parent=0 // pred_fallthru
    _
  // Predicated region
  $region10: #{_mlp_net_forward_impl.1} parent=0 // pred_check
    _
  $region11: #{_mlp_net_forward_impl.1} parent=0 // pred_check_branch
    %15 = sbr.rel (0) target = $region13
  $region12: #{_mlp_net_forward_impl.1} parent=0 // pred_region
    _
  $region13: #{_mlp_net_forward_impl.1} parent=0 // pred_fallthru
    _
  // Predicated region
  $region14: #{_mlp_net_forward_impl.1} parent=0 // pred_check
    _
  $region15: #{_mlp_net_forward_impl.1} parent=0 // pred_check_branch
    %17 = sbr.rel (0) target = $region17
  $region16: #{_mlp_net_forward_impl.1} parent=0 // pred_region
    _
  $region17: #{_mlp_net_forward_impl.1} parent=0 // pred_fallthru
    _
  // Predicated region
  $region18: #{_mlp_net_forward_impl.1} parent=0 // pred_check
    _
  $region19: #{_mlp_net_forward_impl.1} parent=0 // pred_check_branch
    %19 = sbr.rel (0) target = $region21
  $region20: #{_mlp_net_forward_impl.1} parent=0 // pred_region
    _
  $region21: #{_mlp_net_forward_impl.1} parent=0 // pred_fallthru
    _
  %v21 = vld [vmem:[%s0] sm:$0xf]
  %v22 = vld [vmem:[%s0 + $0x4] sm:$0xf]
  %v23 = vld [vmem:[%s1] sm:$0xf]
  %v24 = vld [vmem:[%s1 + $0x4] sm:$0xf]
  %v25 = vld [vmem:[%s1 + $0x8] sm:$0xf]
  %v26 = vld [vmem:[%s1 + $0xc] sm:$0xf]
  %v27 = vld [vmem:[%s1 + $0x10] sm:$0xf]
  %v28 = vld [vmem:[%s1 + $0x14] sm:$0xf]
  %v29 = vld [vmem:[%s1 + $0x18] sm:$0xf]
  %v30 = vld [vmem:[%s1 + $0x1c] sm:$0xf]
  %v31 = vld [vmem:[%s1 + $0x20] sm:$0xf]
  %v32 = vld [vmem:[%s1 + $0x24] sm:$0xf]
  %v33 = vld [vmem:[%s1 + $0x28] sm:$0xf]
  %v34 = vld [vmem:[%s1 + $0x2c] sm:$0xf]
  %v35 = vld [vmem:[%s1 + $0x30] sm:$0xf]
  %v36 = vld [vmem:[%s1 + $0x34] sm:$0xf]
  %v37 = vld [vmem:[%s1 + $0x38] sm:$0xf]
  %v38 = vld [vmem:[%s1 + $0x3c] sm:$0xf]
  %v39 = vld [vmem:[%s2] sm:$0x1]
  %v41 = vlaneseq
  %v42 = vshrl.u32 %v41, 7
  %v43 = vsub.s32 0, %v42
  %v44 = vrot.slane %v39, %v43
  %v48 = vunpack.c.l.b16 %v21
  %v49 = vunpack.c.l.b16 %v22
  %v50 = vpack.c.b16 %v49, %v48
  %v68 = vunpack.c.l.b16 %v23
  %v69 = vunpack.c.l.b16 %v24
  %v70 = vunpack.c.l.b16 %v25
  %v71 = vunpack.c.l.b16 %v26
  %v72 = vunpack.c.l.b16 %v27
  %v73 = vunpack.c.l.b16 %v28
  %v74 = vunpack.c.l.b16 %v29
  %v75 = vunpack.c.l.b16 %v30
  %v76 = vunpack.c.l.b16 %v31
  %v77 = vunpack.c.l.b16 %v32
  %v78 = vunpack.c.l.b16 %v33
  %v79 = vunpack.c.l.b16 %v34
  %v80 = vunpack.c.l.b16 %v35
  %v81 = vunpack.c.l.b16 %v36
  %v82 = vunpack.c.l.b16 %v37
  %v83 = vunpack.c.l.b16 %v38
  %v84 = vpack.c.b16 %v69, %v68
  %v85 = vpack.c.b16 %v71, %v70
  %v86 = vpack.c.b16 %v73, %v72
  %v87 = vpack.c.b16 %v75, %v74
  %v88 = vpack.c.b16 %v77, %v76
  %v89 = vpack.c.b16 %v79, %v78
  %v90 = vpack.c.b16 %v81, %v80
  %v91 = vpack.c.b16 %v83, %v82
  %100 = vmatprep.subr.bf16.mxu0 0
  %101 = vmatpush1.bf16.msra.mxu0 %v91
  %102 = vmatprep.subr.bf16.mxu0 0
  %103 = vmatpush1.bf16.msra.mxu0 %v90
  %104 = vmatprep.subr.bf16.mxu0 0
  %105 = vmatpush1.bf16.msra.mxu0 %v89
  %106 = vmatprep.subr.bf16.mxu0 0
  %107 = vmatpush1.bf16.msra.mxu0 %v88
  %108 = vmatprep.subr.bf16.mxu0 0
  %109 = vmatpush1.bf16.msra.mxu0 %v87
  %110 = vmatprep.subr.bf16.mxu0 0
  %111 = vmatpush1.bf16.msra.mxu0 %v86
  %112 = vmatprep.subr.bf16.mxu0 0
  %113 = vmatpush1.bf16.msra.mxu0 %v85
  %114 = vmatprep.subr.bf16.mxu0 0
  %115 = vmatpush1.bf16.msra.mxu0 %v84
  %116 = vmatprep.subr.bf16.mxu0 0
  %117 = vmatpush2.bf16.msra.mxu0 0
  %118 = vmatprep.subr.bf16.mxu0 0
  %119 = vmatpush2.bf16.msra.mxu0 0
  %120 = vmatprep.subr.bf16.mxu0 0
  %121 = vmatpush2.bf16.msra.mxu0 0
  %122 = vmatprep.subr.bf16.mxu0 0
  %123 = vmatpush2.bf16.msra.mxu0 0
  %124 = vmatprep.subr.bf16.mxu0 0
  %125 = vmatpush2.bf16.msra.mxu0 0
  %126 = vmatprep.subr.bf16.mxu0 0
  %127 = vmatpush2.bf16.msra.mxu0 0
  %128 = vmatprep.subr.bf16.mxu0 0
  %129 = vmatpush2.bf16.msra.mxu0 0
  %130 = vmatprep.subr.bf16.mxu0 0
  %131 = vmatpush2.bf16.msra.mxu0 0
  %132 = vmatprep.mubr.bf16.mxu0 0
  %133 = vmatmul.mubr.bf16.gmra.mxu0 %v50
  %v134 = vpop.f32.mrf.mxu0
  %v135 = vadd.f32 %v44, %v134
  %v136 = vpop.f32.mrf.mxu0
  %v137 = vpop.f32.mrf.mxu0
  %v138 = vadd.f32 %v44, %v137
  %v139 = vpop.f32.mrf.mxu0
  %140 = vdwg.mxu0
  %v141 = vxor.u32 %v135, 2147483648
  %v142 = vxor.u32 %v138, 2147483648
  %v143 = vmul.f32 %v141, 1.442695
  %v144 = vpow.pop %v143
  %v145 = vmul.f32 %v142, 1.442695
  %v146 = vpow.pop %v145
  %v147 = vadd.f32 %v144, 1.0
  %v148 = vadd.f32 %v146, 1.0
  %v149 = vrcp.pop %v147
  %v150 = vmul.f32 1.0, %v149
  %v151 = vrcp.pop %v148
  %v152 = vmul.f32 1.0, %v151
  %v153 = vmul.f32 %v135, %v150
  %v154 = vmul.f32 %v138, %v152
  %v155 = vpack.c.bf16 %v154, %v153
  %v156 = vld [vmem:[%s3] sm:$0xf]
  %v157 = vld [vmem:[%s3 + $0x4] sm:$0xf]
  %v158 = vld [vmem:[%s3 + $0x8] sm:$0xf]
  %v159 = vld [vmem:[%s3 + $0xc] sm:$0xf]
  %v160 = vld [vmem:[%s3 + $0x10] sm:$0xf]
  %v161 = vld [vmem:[%s3 + $0x14] sm:$0xf]
  %v162 = vld [vmem:[%s3 + $0x18] sm:$0xf]
  %v163 = vld [vmem:[%s3 + $0x1c] sm:$0xf]
  %v164 = vld [vmem:[%s3 + $0x20] sm:$0xf]
  %v165 = vld [vmem:[%s3 + $0x24] sm:$0xf]
  %v166 = vld [vmem:[%s3 + $0x28] sm:$0xf]
  %v167 = vld [vmem:[%s3 + $0x2c] sm:$0xf]
  %v168 = vld [vmem:[%s3 + $0x30] sm:$0xf]
  %v169 = vld [vmem:[%s3 + $0x34] sm:$0xf]
  %v170 = vld [vmem:[%s3 + $0x38] sm:$0xf]
  %v171 = vld [vmem:[%s3 + $0x3c] sm:$0xf]
  %v172 = vld [vmem:[%s4] sm:$0x1]
  %v174 = vlaneseq
  %v175 = vshrl.u32 %v174, 7
  %v176 = vsub.s32 0, %v175
  %v177 = vrot.slane %v172, %v176
  %v195 = vunpack.c.l.b16 %v156
  %v196 = vunpack.c.l.b16 %v157
  %v197 = vunpack.c.l.b16 %v158
  %v198 = vunpack.c.l.b16 %v159
  %v199 = vunpack.c.l.b16 %v160
  %v200 = vunpack.c.l.b16 %v161
  %v201 = vunpack.c.l.b16 %v162
  %v202 = vunpack.c.l.b16 %v163
  %v203 = vunpack.c.l.b16 %v164
  %v204 = vunpack.c.l.b16 %v165
  %v205 = vunpack.c.l.b16 %v166
  %v206 = vunpack.c.l.b16 %v167
  %v207 = vunpack.c.l.b16 %v168
  %v208 = vunpack.c.l.b16 %v169
  %v209 = vunpack.c.l.b16 %v170
  %v210 = vunpack.c.l.b16 %v171
  %v211 = vpack.c.b16 %v196, %v195
  %v212 = vpack.c.b16 %v198, %v197
  %v213 = vpack.c.b16 %v200, %v199
  %v214 = vpack.c.b16 %v202, %v201
  %v215 = vpack.c.b16 %v204, %v203
  %v216 = vpack.c.b16 %v206, %v205
  %v217 = vpack.c.b16 %v208, %v207
  %v218 = vpack.c.b16 %v210, %v209
  %227 = vmatprep.subr.bf16.mxu0 0
  %228 = vmatpush1.bf16.msra.mxu0 %v218
  %229 = vmatprep.subr.bf16.mxu0 0
  %230 = vmatpush1.bf16.msra.mxu0 %v217
  %231 = vmatprep.subr.bf16.mxu0 0
  %232 = vmatpush1.bf16.msra.mxu0 %v216
  %233 = vmatprep.subr.bf16.mxu0 0
  %234 = vmatpush1.bf16.msra.mxu0 %v215
  %235 = vmatprep.subr.bf16.mxu0 0
  %236 = vmatpush1.bf16.msra.mxu0 %v214
  %237 = vmatprep.subr.bf16.mxu0 0
  %238 = vmatpush1.bf16.msra.mxu0 %v213
  %239 = vmatprep.subr.bf16.mxu0 0
  %240 = vmatpush1.bf16.msra.mxu0 %v212
  %241 = vmatprep.subr.bf16.mxu0 0
  %242 = vmatpush1.bf16.msra.mxu0 %v211
  %243 = vmatprep.subr.bf16.mxu0 0
  %244 = vmatpush2.bf16.msra.mxu0 0
  %245 = vmatprep.subr.bf16.mxu0 0
  %246 = vmatpush2.bf16.msra.mxu0 0
  %247 = vmatprep.subr.bf16.mxu0 0
  %248 = vmatpush2.bf16.msra.mxu0 0
  %249 = vmatprep.subr.bf16.mxu0 0
  %250 = vmatpush2.bf16.msra.mxu0 0
  %251 = vmatprep.subr.bf16.mxu0 0
  %252 = vmatpush2.bf16.msra.mxu0 0
  %253 = vmatprep.subr.bf16.mxu0 0
  %254 = vmatpush2.bf16.msra.mxu0 0
  %255 = vmatprep.subr.bf16.mxu0 0
  %256 = vmatpush2.bf16.msra.mxu0 0
  %257 = vmatprep.subr.bf16.mxu0 0
  %258 = vmatpush2.bf16.msra.mxu0 0
  %259 = vmatprep.mubr.bf16.mxu0 0
  %260 = vmatmul.mubr.bf16.gmra.mxu0 %v155
  %v261 = vpop.f32.mrf.mxu0
  %v262 = vadd.f32 %v177, %v261
  %v263 = vpop.f32.mrf.mxu0
  %v264 = vpop.f32.mrf.mxu0
  %v265 = vadd.f32 %v177, %v264
  %v266 = vpop.f32.mrf.mxu0
  %267 = vdwg.mxu0
  %v268 = vxor.u32 %v262, 2147483648
  %v269 = vxor.u32 %v265, 2147483648
  %v270 = vmul.f32 %v268, 1.442695
  %v271 = vpow.pop %v270
  %v272 = vmul.f32 %v269, 1.442695
  %v273 = vpow.pop %v272
  %v274 = vadd.f32 %v271, 1.0
  %v275 = vadd.f32 %v273, 1.0
  %v276 = vrcp.pop %v274
  %v277 = vmul.f32 1.0, %v276
  %v278 = vrcp.pop %v275
  %v279 = vmul.f32 1.0, %v278
  %280 = vst [vmem:[%s5] sm:$0xff] %v277
  %281 = vst [vmem:[%s5 + $0x8] sm:$0xff] %v279
  // Predicated region
  $region22: #{_mlp_net_forward_impl.1} parent=0 // pred_check
    _
  $region23: #{_mlp_net_forward_impl.1} parent=0 // pred_check_branch
    %283 = sbr.rel (0) target = $region25
  $region24: #{_mlp_net_forward_impl.1} parent=0 // pred_region
    _
  $region25: #{_mlp_net_forward_impl.1} parent=0 // pred_fallthru
    _
  // Predicated region
  $region26: #{_mlp_net_forward_impl.1} parent=0 // pred_check
    _
  $region27: #{_mlp_net_forward_impl.1} parent=0 // pred_check_branch
    %285 = sbr.rel (0) target = $region29
  $region28: #{_mlp_net_forward_impl.1} parent=0 // pred_region
    _
  $region29: #{_mlp_net_forward_impl.1} parent=0 // pred_fallthru
    _

</llo_original>
